<compile_context>
chip_gen: v7x
topology: tpu7x:2x2x1
jax: 0.10.0
libtpu: 0.0.40
codegen_flags: <defaults>
</compile_context>

<pallas_src>
import functools

import jax
import jax.numpy as jnp
from jax import lax
from jax.experimental import pallas as pl
from jax.experimental.pallas import tpu as pltpu


def _asym_conv_kernel(x1_ref, x2_ref, w_ref, b_ref, o_ref, *, offset, K):
    # x1_ref: (1, C_in, W1)  main block of columns starting at l*TL
    # x2_ref: (1, C_in, W2)  halo block (columns following the main block)
    # w_ref:  (C_out*C_in*K,)  SMEM scalars, layout w[o, c, k]
    # b_ref:  (C_out,)         SMEM scalars
    # o_ref:  (1, C_out, T)    lane-dense output tile
    C_in = x1_ref.shape[1]
    C_out = o_ref.shape[1]
    T = o_ref.shape[2]

    xw = jnp.concatenate(
        [x1_ref[0].astype(jnp.float32), x2_ref[0].astype(jnp.float32)],
        axis=-1)                                    # (C_in, W1 + W2)

    # Per-output-channel accumulators, initialized with the bias.
    accs = [jnp.full((1, T), b_ref[o], dtype=jnp.float32) for o in range(C_out)]

    # VPU broadcast-MAC over the K*C_in*C_out scalar weights; each (c, k)
    # lane-shifted slice is built once and reused for every output channel.
    for c in range(C_in):
        for k in range(K):
            sl = xw[c:c + 1, offset + k: offset + k + T]   # (1, T)
            for o in range(C_out):
                w = w_ref[(o * C_in + c) * K + k]
                accs[o] = accs[o] + w * sl

    o_ref[0] = jnp.concatenate(accs, axis=0).astype(o_ref.dtype)


def asymmetric_conv(x, weight, bias, *, cl, left, right, tl=2048):
    """Pallas implementation of AsymmetricConv.forward (clipping='cl-based').

    x:      (N, C_in, L)        - PyTorch NCL layout (kept end-to-end)
    weight: (C_out, C_in, K)    - PyTorch Conv1d weight, K = left + right + 1
    bias:   (C_out,)
    returns (N, C_out, L - cl)
    """
    assert cl % 2 == 0
    assert max(left, right) <= cl // 2
    N, C_in, L = x.shape
    C_out, C_in_w, K = weight.shape
    assert C_in_w == C_in and K == left + right + 1
    L_out = L - cl
    assert L_out > 0
    offset = cl // 2 - left            # static, >= 0
    halo = cl // 2 + right             # == offset + K - 1, static

    def round_up(a, b):
        return -(-a // b) * b

    H = round_up(max(halo, 1), 128)    # halo block width (lane-aligned)

    if L_out >= H:
        # Tiled path: TL is a multiple of H (hence of 128) and <= L_out, so all
        # block minor dims satisfy the (8,128) rule; ragged tails are handled
        # by Pallas' partial-block copy/masking.
        TL = max(H, (min(tl, L_out) // H) * H)
        num_tiles = pl.cdiv(L_out, TL)
        ratio = TL // H
        nhb = pl.cdiv(L, H)            # number of H-blocks along L

        x1_spec = pl.BlockSpec((1, C_in, TL), lambda n, l: (n, 0, l))
        # Halo block = next H columns; clamp for the last tile (whose valid
        # outputs never need columns beyond x1's in-bounds prefix).
        x2_spec = pl.BlockSpec(
            (1, C_in, H),
            lambda n, l: (n, 0, jnp.minimum((l + 1) * ratio, nhb - 1)))
        out_spec = pl.BlockSpec((1, C_out, TL), lambda n, l: (n, 0, l))
    else:
        # Tiny-length fallback: single tile using full (untiled) dims.
        num_tiles = 1
        x1_spec = pl.BlockSpec((1, C_in, L), lambda n, l: (n, 0, 0))
        x2_spec = pl.BlockSpec((1, C_in, L), lambda n, l: (n, 0, 0))
        out_spec = pl.BlockSpec((1, C_out, L_out), lambda n, l: (n, 0, 0))

    w_flat = weight.reshape(-1).astype(jnp.float32)   # tiny, goes to SMEM
    b_flat = bias.reshape(-1).astype(jnp.float32)

    kernel = functools.partial(_asym_conv_kernel, offset=offset, K=K)

    return pl.pallas_call(
        kernel,
        out_shape=jax.ShapeDtypeStruct((N, C_out, L_out), x.dtype),
        grid=(N, num_tiles),
        in_specs=[
            x1_spec,
            x2_spec,
            pl.BlockSpec(memory_space=pltpu.MemorySpace.SMEM),
            pl.BlockSpec(memory_space=pltpu.MemorySpace.SMEM),
        ],
        out_specs=out_spec,
        compiler_params=pltpu.CompilerParams(
            dimension_semantics=("parallel", "parallel")),
    )(x, x, w_flat, b_flat)


def _reference_forward(x_ncl, weight, bias, *, cl, left, right):
    """Literal translation of the PyTorch forward: pad -> conv1d -> clip."""
    xp = jnp.pad(x_ncl, ((0, 0), (0, 0), (left, right)))
    dn = lax.conv_dimension_numbers(xp.shape, weight.shape,
                                    ("NCH", "OIH", "NCH"))
    y = lax.conv_general_dilated(xp, weight, window_strides=(1,),
                                 padding="VALID", dimension_numbers=dn)
    y = y + bias[None, :, None]
    return y[:, :, cl // 2: y.shape[-1] - cl // 2]


if __name__ == "__main__":
    def run_case(N, C_in, C_out, L, cl, left, right, tl, key):
        K = left + right + 1
        kx, kw, kb = jax.random.split(key, 3)
        x = jax.random.normal(kx, (N, C_in, L), dtype=jnp.float32)
        weight = jax.random.normal(kw, (C_out, C_in, K), dtype=jnp.float32) * 0.1
        bias = jax.random.normal(kb, (C_out,), dtype=jnp.float32) * 0.1

        out = asymmetric_conv(x, weight, bias, cl=cl, left=left, right=right,
                              tl=tl)
        out = jax.block_until_ready(out)

        ref = _reference_forward(x, weight, bias, cl=cl, left=left, right=right)
        assert out.shape == (N, C_out, L - cl), out.shape
        assert jnp.allclose(out, ref, atol=1e-5, rtol=1e-5), (
            float(jnp.max(jnp.abs(out - ref))))

    key = jax.random.PRNGKey(0)
    k1, k2 = jax.random.split(key)

    # 1) Small, module-like shapes (single-tile fallback path, offset > 0).
    run_case(N=2, C_in=4, C_out=3, L=16, cl=4, left=1, right=1, tl=2048, key=k1)

    # 2) Multi-tile path: halo crossing at tile boundaries, clamped halo on the
    #    last tile, ragged last output tile.
    run_case(N=2, C_in=4, C_out=3, L=300, cl=12, left=6, right=4, tl=128, key=k2)

    print("KERNEL_OK")
</pallas_src>

<mosaic_0001>
module attributes {stable_mosaic.version = 11 : i64} {
  func.func @_asym_conv_kernel(%arg0: i32, %arg1: i32, %arg2: memref<1x4x16xf32, #tpu.memory_space<vmem>>, %arg3: memref<1x4x16xf32, #tpu.memory_space<vmem>>, %arg4: memref<36xf32, #tpu.memory_space<smem>>, %arg5: memref<3xf32, #tpu.memory_space<smem>>, %arg6: memref<1x3x12xf32, #tpu.memory_space<vmem>>) attributes {dimension_semantics = [#tpu.dimension_semantics<parallel>, #tpu.dimension_semantics<parallel>], iteration_bounds = array<i64: 2, 1>, scalar_prefetch = 0 : i64, scratch_operands = 0 : i64, tpu.core_type = #tpu.core_type<tc>, window_params = [{transform_indices = @transform_0, window_bounds = array<i64: 1, 4, 16>}, {transform_indices = @transform_1, window_bounds = array<i64: 1, 4, 16>}, {transform_indices = @transform_2, window_bounds = array<i64: 36>}, {transform_indices = @transform_3, window_bounds = array<i64: 3>}, {transform_indices = @transform_4, window_bounds = array<i64: 1, 3, 12>}]} {
    %c0 = arith.constant 0 : index
    %c0_0 = arith.constant 0 : index
    %c0_1 = arith.constant 0 : index
    %0 = vector.load %arg2[%c0, %c0_0, %c0_1] : memref<1x4x16xf32, #tpu.memory_space<vmem>>, vector<1x4x16xf32>
    %1 = vector.shape_cast %0 : vector<1x4x16xf32> to vector<4x16xf32>
    %c0_2 = arith.constant 0 : index
    %c0_3 = arith.constant 0 : index
    %c0_4 = arith.constant 0 : index
    %2 = vector.load %arg3[%c0_2, %c0_3, %c0_4] : memref<1x4x16xf32, #tpu.memory_space<vmem>>, vector<1x4x16xf32>
    %3 = vector.shape_cast %2 : vector<1x4x16xf32> to vector<4x16xf32>
    %4 = tpu.concatenate %1, %3 in 1 : vector<4x16xf32>, vector<4x16xf32> -> vector<4x32xf32>
    %c0_5 = arith.constant 0 : index
    %5 = memref.load %arg5[%c0_5] : memref<3xf32, #tpu.memory_space<smem>>
    %6 = vector.broadcast %5 : f32 to vector<1x12xf32>
    %c1 = arith.constant 1 : index
    %7 = memref.load %arg5[%c1] : memref<3xf32, #tpu.memory_space<smem>>
    %8 = vector.broadcast %7 : f32 to vector<1x12xf32>
    %c2 = arith.constant 2 : index
    %9 = memref.load %arg5[%c2] : memref<3xf32, #tpu.memory_space<smem>>
    %10 = vector.broadcast %9 : f32 to vector<1x12xf32>
    %11 = vector.extract_strided_slice %4 {offsets = [0, 1], sizes = [1, 12], strides = [1, 1]} : vector<4x32xf32> to vector<1x12xf32>
    %c0_6 = arith.constant 0 : index
    %12 = memref.load %arg4[%c0_6] : memref<36xf32, #tpu.memory_space<smem>>
    %13 = vector.broadcast %12 : f32 to vector<1x12xf32>
    %14 = arith.mulf %13, %11 : vector<1x12xf32>
    %15 = arith.addf %6, %14 : vector<1x12xf32>
    %c12 = arith.constant 12 : index
    %16 = memref.load %arg4[%c12] : memref<36xf32, #tpu.memory_space<smem>>
    %17 = vector.broadcast %16 : f32 to vector<1x12xf32>
    %18 = arith.mulf %17, %11 : vector<1x12xf32>
    %19 = arith.addf %8, %18 : vector<1x12xf32>
    %c24 = arith.constant 24 : index
    %20 = memref.load %arg4[%c24] : memref<36xf32, #tpu.memory_space<smem>>
    %21 = vector.broadcast %20 : f32 to vector<1x12xf32>
    %22 = arith.mulf %21, %11 : vector<1x12xf32>
    %23 = arith.addf %10, %22 : vector<1x12xf32>
    %24 = vector.extract_strided_slice %4 {offsets = [0, 2], sizes = [1, 12], strides = [1, 1]} : vector<4x32xf32> to vector<1x12xf32>
    %c1_7 = arith.constant 1 : index
    %25 = memref.load %arg4[%c1_7] : memref<36xf32, #tpu.memory_space<smem>>
    %26 = vector.broadcast %25 : f32 to vector<1x12xf32>
    %27 = arith.mulf %26, %24 : vector<1x12xf32>
    %28 = arith.addf %15, %27 : vector<1x12xf32>
    %c13 = arith.constant 13 : index
    %29 = memref.load %arg4[%c13] : memref<36xf32, #tpu.memory_space<smem>>
    %30 = vector.broadcast %29 : f32 to vector<1x12xf32>
    %31 = arith.mulf %30, %24 : vector<1x12xf32>
    %32 = arith.addf %19, %31 : vector<1x12xf32>
    %c25 = arith.constant 25 : index
    %33 = memref.load %arg4[%c25] : memref<36xf32, #tpu.memory_space<smem>>
    %34 = vector.broadcast %33 : f32 to vector<1x12xf32>
    %35 = arith.mulf %34, %24 : vector<1x12xf32>
    %36 = arith.addf %23, %35 : vector<1x12xf32>
    %37 = vector.extract_strided_slice %4 {offsets = [0, 3], sizes = [1, 12], strides = [1, 1]} : vector<4x32xf32> to vector<1x12xf32>
    %c2_8 = arith.constant 2 : index
    %38 = memref.load %arg4[%c2_8] : memref<36xf32, #tpu.memory_space<smem>>
    %39 = vector.broadcast %38 : f32 to vector<1x12xf32>
    %40 = arith.mulf %39, %37 : vector<1x12xf32>
    %41 = arith.addf %28, %40 : vector<1x12xf32>
    %c14 = arith.constant 14 : index
    %42 = memref.load %arg4[%c14] : memref<36xf32, #tpu.memory_space<smem>>
    %43 = vector.broadcast %42 : f32 to vector<1x12xf32>
    %44 = arith.mulf %43, %37 : vector<1x12xf32>
    %45 = arith.addf %32, %44 : vector<1x12xf32>
    %c26 = arith.constant 26 : index
    %46 = memref.load %arg4[%c26] : memref<36xf32, #tpu.memory_space<smem>>
    %47 = vector.broadcast %46 : f32 to vector<1x12xf32>
    %48 = arith.mulf %47, %37 : vector<1x12xf32>
    %49 = arith.addf %36, %48 : vector<1x12xf32>
    %50 = vector.extract_strided_slice %4 {offsets = [1, 1], sizes = [1, 12], strides = [1, 1]} : vector<4x32xf32> to vector<1x12xf32>
    %c3 = arith.constant 3 : index
    %51 = memref.load %arg4[%c3] : memref<36xf32, #tpu.memory_space<smem>>
    %52 = vector.broadcast %51 : f32 to vector<1x12xf32>
    %53 = arith.mulf %52, %50 : vector<1x12xf32>
    %54 = arith.addf %41, %53 : vector<1x12xf32>
    %c15 = arith.constant 15 : index
    %55 = memref.load %arg4[%c15] : memref<36xf32, #tpu.memory_space<smem>>
    %56 = vector.broadcast %55 : f32 to vector<1x12xf32>
    %57 = arith.mulf %56, %50 : vector<1x12xf32>
    %58 = arith.addf %45, %57 : vector<1x12xf32>
    %c27 = arith.constant 27 : index
    %59 = memref.load %arg4[%c27] : memref<36xf32, #tpu.memory_space<smem>>
    %60 = vector.broadcast %59 : f32 to vector<1x12xf32>
    %61 = arith.mulf %60, %50 : vector<1x12xf32>
    %62 = arith.addf %49, %61 : vector<1x12xf32>
    %63 = vector.extract_strided_slice %4 {offsets = [1, 2], sizes = [1, 12], strides = [1, 1]} : vector<4x32xf32> to vector<1x12xf32>
    %c4 = arith.constant 4 : index
    %64 = memref.load %arg4[%c4] : memref<36xf32, #tpu.memory_space<smem>>
    %65 = vector.broadcast %64 : f32 to vector<1x12xf32>
    %66 = arith.mulf %65, %63 : vector<1x12xf32>
    %67 = arith.addf %54, %66 : vector<1x12xf32>
    %c16 = arith.constant 16 : index
    %68 = memref.load %arg4[%c16] : memref<36xf32, #tpu.memory_space<smem>>
    %69 = vector.broadcast %68 : f32 to vector<1x12xf32>
    %70 = arith.mulf %69, %63 : vector<1x12xf32>
    %71 = arith.addf %58, %70 : vector<1x12xf32>
    %c28 = arith.constant 28 : index
    %72 = memref.load %arg4[%c28] : memref<36xf32, #tpu.memory_space<smem>>
    %73 = vector.broadcast %72 : f32 to vector<1x12xf32>
    %74 = arith.mulf %73, %63 : vector<1x12xf32>
    %75 = arith.addf %62, %74 : vector<1x12xf32>
    %76 = vector.extract_strided_slice %4 {offsets = [1, 3], sizes = [1, 12], strides = [1, 1]} : vector<4x32xf32> to vector<1x12xf32>
    %c5 = arith.constant 5 : index
    %77 = memref.load %arg4[%c5] : memref<36xf32, #tpu.memory_space<smem>>
    %78 = vector.broadcast %77 : f32 to vector<1x12xf32>
    %79 = arith.mulf %78, %76 : vector<1x12xf32>
    %80 = arith.addf %67, %79 : vector<1x12xf32>
    %c17 = arith.constant 17 : index
    %81 = memref.load %arg4[%c17] : memref<36xf32, #tpu.memory_space<smem>>
    %82 = vector.broadcast %81 : f32 to vector<1x12xf32>
    %83 = arith.mulf %82, %76 : vector<1x12xf32>
    %84 = arith.addf %71, %83 : vector<1x12xf32>
    %c29 = arith.constant 29 : index
    %85 = memref.load %arg4[%c29] : memref<36xf32, #tpu.memory_space<smem>>
    %86 = vector.broadcast %85 : f32 to vector<1x12xf32>
    %87 = arith.mulf %86, %76 : vector<1x12xf32>
    %88 = arith.addf %75, %87 : vector<1x12xf32>
    %89 = vector.extract_strided_slice %4 {offsets = [2, 1], sizes = [1, 12], strides = [1, 1]} : vector<4x32xf32> to vector<1x12xf32>
    %c6 = arith.constant 6 : index
    %90 = memref.load %arg4[%c6] : memref<36xf32, #tpu.memory_space<smem>>
    %91 = vector.broadcast %90 : f32 to vector<1x12xf32>
    %92 = arith.mulf %91, %89 : vector<1x12xf32>
    %93 = arith.addf %80, %92 : vector<1x12xf32>
    %c18 = arith.constant 18 : index
    %94 = memref.load %arg4[%c18] : memref<36xf32, #tpu.memory_space<smem>>
    %95 = vector.broadcast %94 : f32 to vector<1x12xf32>
    %96 = arith.mulf %95, %89 : vector<1x12xf32>
    %97 = arith.addf %84, %96 : vector<1x12xf32>
    %c30 = arith.constant 30 : index
    %98 = memref.load %arg4[%c30] : memref<36xf32, #tpu.memory_space<smem>>
    %99 = vector.broadcast %98 : f32 to vector<1x12xf32>
    %100 = arith.mulf %99, %89 : vector<1x12xf32>
    %101 = arith.addf %88, %100 : vector<1x12xf32>
    %102 = vector.extract_strided_slice %4 {offsets = [2, 2], sizes = [1, 12], strides = [1, 1]} : vector<4x32xf32> to vector<1x12xf32>
    %c7 = arith.constant 7 : index
    %103 = memref.load %arg4[%c7] : memref<36xf32, #tpu.memory_space<smem>>
    %104 = vector.broadcast %103 : f32 to vector<1x12xf32>
    %105 = arith.mulf %104, %102 : vector<1x12xf32>
    %106 = arith.addf %93, %105 : vector<1x12xf32>
    %c19 = arith.constant 19 : index
    %107 = memref.load %arg4[%c19] : memref<36xf32, #tpu.memory_space<smem>>
    %108 = vector.broadcast %107 : f32 to vector<1x12xf32>
    %109 = arith.mulf %108, %102 : vector<1x12xf32>
    %110 = arith.addf %97, %109 : vector<1x12xf32>
    %c31 = arith.constant 31 : index
    %111 = memref.load %arg4[%c31] : memref<36xf32, #tpu.memory_space<smem>>
    %112 = vector.broadcast %111 : f32 to vector<1x12xf32>
    %113 = arith.mulf %112, %102 : vector<1x12xf32>
    %114 = arith.addf %101, %113 : vector<1x12xf32>
    %115 = vector.extract_strided_slice %4 {offsets = [2, 3], sizes = [1, 12], strides = [1, 1]} : vector<4x32xf32> to vector<1x12xf32>
    %c8 = arith.constant 8 : index
    %116 = memref.load %arg4[%c8] : memref<36xf32, #tpu.memory_space<smem>>
    %117 = vector.broadcast %116 : f32 to vector<1x12xf32>
    %118 = arith.mulf %117, %115 : vector<1x12xf32>
    %119 = arith.addf %106, %118 : vector<1x12xf32>
    %c20 = arith.constant 20 : index
    %120 = memref.load %arg4[%c20] : memref<36xf32, #tpu.memory_space<smem>>
    %121 = vector.broadcast %120 : f32 to vector<1x12xf32>
    %122 = arith.mulf %121, %115 : vector<1x12xf32>
    %123 = arith.addf %110, %122 : vector<1x12xf32>
    %c32 = arith.constant 32 : index
    %124 = memref.load %arg4[%c32] : memref<36xf32, #tpu.memory_space<smem>>
    %125 = vector.broadcast %124 : f32 to vector<1x12xf32>
    %126 = arith.mulf %125, %115 : vector<1x12xf32>
    %127 = arith.addf %114, %126 : vector<1x12xf32>
    %128 = vector.extract_strided_slice %4 {offsets = [3, 1], sizes = [1, 12], strides = [1, 1]} : vector<4x32xf32> to vector<1x12xf32>
    %c9 = arith.constant 9 : index
    %129 = memref.load %arg4[%c9] : memref<36xf32, #tpu.memory_space<smem>>
    %130 = vector.broadcast %129 : f32 to vector<1x12xf32>
    %131 = arith.mulf %130, %128 : vector<1x12xf32>
    %132 = arith.addf %119, %131 : vector<1x12xf32>
    %c21 = arith.constant 21 : index
    %133 = memref.load %arg4[%c21] : memref<36xf32, #tpu.memory_space<smem>>
    %134 = vector.broadcast %133 : f32 to vector<1x12xf32>
    %135 = arith.mulf %134, %128 : vector<1x12xf32>
    %136 = arith.addf %123, %135 : vector<1x12xf32>
    %c33 = arith.constant 33 : index
    %137 = memref.load %arg4[%c33] : memref<36xf32, #tpu.memory_space<smem>>
    %138 = vector.broadcast %137 : f32 to vector<1x12xf32>
    %139 = arith.mulf %138, %128 : vector<1x12xf32>
    %140 = arith.addf %127, %139 : vector<1x12xf32>
    %141 = vector.extract_strided_slice %4 {offsets = [3, 2], sizes = [1, 12], strides = [1, 1]} : vector<4x32xf32> to vector<1x12xf32>
    %c10 = arith.constant 10 : index
    %142 = memref.load %arg4[%c10] : memref<36xf32, #tpu.memory_space<smem>>
    %143 = vector.broadcast %142 : f32 to vector<1x12xf32>
    %144 = arith.mulf %143, %141 : vector<1x12xf32>
    %145 = arith.addf %132, %144 : vector<1x12xf32>
    %c22 = arith.constant 22 : index
    %146 = memref.load %arg4[%c22] : memref<36xf32, #tpu.memory_space<smem>>
    %147 = vector.broadcast %146 : f32 to vector<1x12xf32>
    %148 = arith.mulf %147, %141 : vector<1x12xf32>
    %149 = arith.addf %136, %148 : vector<1x12xf32>
    %c34 = arith.constant 34 : index
    %150 = memref.load %arg4[%c34] : memref<36xf32, #tpu.memory_space<smem>>
    %151 = vector.broadcast %150 : f32 to vector<1x12xf32>
    %152 = arith.mulf %151, %141 : vector<1x12xf32>
    %153 = arith.addf %140, %152 : vector<1x12xf32>
    %154 = vector.extract_strided_slice %4 {offsets = [3, 3], sizes = [1, 12], strides = [1, 1]} : vector<4x32xf32> to vector<1x12xf32>
    %c11 = arith.constant 11 : index
    %155 = memref.load %arg4[%c11] : memref<36xf32, #tpu.memory_space<smem>>
    %156 = vector.broadcast %155 : f32 to vector<1x12xf32>
    %157 = arith.mulf %156, %154 : vector<1x12xf32>
    %158 = arith.addf %145, %157 : vector<1x12xf32>
    %c23 = arith.constant 23 : index
    %159 = memref.load %arg4[%c23] : memref<36xf32, #tpu.memory_space<smem>>
    %160 = vector.broadcast %159 : f32 to vector<1x12xf32>
    %161 = arith.mulf %160, %154 : vector<1x12xf32>
    %162 = arith.addf %149, %161 : vector<1x12xf32>
    %c35 = arith.constant 35 : index
    %163 = memref.load %arg4[%c35] : memref<36xf32, #tpu.memory_space<smem>>
    %164 = vector.broadcast %163 : f32 to vector<1x12xf32>
    %165 = arith.mulf %164, %154 : vector<1x12xf32>
    %166 = arith.addf %153, %165 : vector<1x12xf32>
    %167 = tpu.concatenate %158, %162, %166 in 0 : vector<1x12xf32>, vector<1x12xf32>, vector<1x12xf32> -> vector<3x12xf32>
    %c0_9 = arith.constant 0 : index
    %c0_10 = arith.constant 0 : index
    %c0_11 = arith.constant 0 : index
    %168 = vector.load %arg6[%c0_9, %c0_10, %c0_11] : memref<1x3x12xf32, #tpu.memory_space<vmem>>, vector<1x3x12xf32>
    %169 = vector.shape_cast %168 : vector<1x3x12xf32> to vector<3x12xf32>
    %170 = vector.shape_cast %167 : vector<3x12xf32> to vector<1x3x12xf32>
    tpu.vector_store %arg6[%c0_9, %c0_10, %c0_11], %170 {strides = array<i32>} : memref<1x3x12xf32, #tpu.memory_space<vmem>>, vector<1x3x12xf32>,
    return
  }
  func.func @transform_0(%arg0: i32, %arg1: i32) -> (i32, i32, i32) {
    %c0_i32 = arith.constant 0 : i32
    %c0_i32_0 = arith.constant 0 : i32
    %c0_i32_1 = arith.constant 0 : i32
    return %arg0, %c0_i32, %c0_i32_0 : i32, i32, i32
  }
  func.func @transform_1(%arg0: i32, %arg1: i32) -> (i32, i32, i32) {
    %c0_i32 = arith.constant 0 : i32
    %c0_i32_0 = arith.constant 0 : i32
    %c0_i32_1 = arith.constant 0 : i32
    return %arg0, %c0_i32, %c0_i32_0 : i32, i32, i32
  }
  func.func @transform_2(%arg0: i32, %arg1: i32) -> i32 {
    %c0_i32 = arith.constant 0 : i32
    %c0_i32_0 = arith.constant 0 : i32
    return %c0_i32 : i32
  }
  func.func @transform_3(%arg0: i32, %arg1: i32) -> i32 {
    %c0_i32 = arith.constant 0 : i32
    %c0_i32_0 = arith.constant 0 : i32
    return %c0_i32 : i32
  }
  func.func @transform_4(%arg0: i32, %arg1: i32) -> (i32, i32, i32) {
    %c0_i32 = arith.constant 0 : i32
    %c0_i32_0 = arith.constant 0 : i32
    %c0_i32_1 = arith.constant 0 : i32
    return %arg0, %c0_i32, %c0_i32_0 : i32, i32, i32
  }
}

</mosaic_0001>

<llo_original>
// kernel: tpu_custom_call.1
$region0: #{tpu_custom_call.1}
  #allocation0 [shape = 'u32[]', space=smem, size = 0x4, offset = 0x4, fixed_abs, tag = 'smem constant byte address 0x4 - core index']
  #allocation1 [shape = 'u32[144,128]{1,0:T(1,128)}', space=vmem, size = 0x12000, scoped, tag = 'internal scratch']
  %s0 = inlined_call_operand.hbm [shape: f32[2,4,16], index: 0, kind: input, shape index: {}]
  %s1 = inlined_call_operand.hbm [shape: f32[2,4,16], index: 1, kind: input, shape index: {}]
  %s2 = inlined_call_operand.vmem [shape: f32[36], index: 2, kind: input, shape index: {}]
  %s3 = inlined_call_operand.vmem [shape: f32[3], index: 3, kind: input, shape index: {}]
  %s4 = inlined_call_operand.vmem [shape: f32[2,3,12], index: 4, kind: output, shape index: {}]
  %s5 = sld [smem:[#allocation0]]
  $region65: #{tpu_custom_call.1} parent=0
    _
  %s7 = ssub.s32 1, %s5
  %s8 = scalar_select 0, %s7, %s5
  $region1: #{tpu_custom_call.1} parent=0
    #allocation2 [shape = 'u8[4096]{0}', space=vmem, size = 0x1000, scoped, tag = 'input window, operand 0']
    #allocation3 [shape = 's32[2]{0}', space=sflag, size = 0x8, scoped, tag = 'scoped memory for tpu_custom_call.1']
    #allocation4 [shape = 's32[2]{0}', space=sflag, size = 0x8, scoped, tag = 'scoped memory for tpu_custom_call.1']
    #allocation5 [shape = 'u8[4096]{0}', space=vmem, size = 0x1000, scoped, tag = 'input window, operand 1']
    #allocation6 [shape = 's32[2]{0}', space=sflag, size = 0x8, scoped, tag = 'scoped memory for tpu_custom_call.1']
    #allocation7 [shape = 'u8[512]{0}', space=smem, size = 0x200, scoped, tag = 'input window, operand 2, single buffered']
    #allocation8 [shape = 'u8[512]{0}', space=smem, size = 0x200, scoped, tag = 'input window, operand 3, single buffered']
    #allocation9 [shape = 's32[1]{0}', space=sflag, size = 0x4, scoped, tag = 'scoped memory for tpu_custom_call.1']
    %9 = vsyncpa [#allocation3], 0
    %s10 = scalar_lea.sflag [#allocation3], 1
    %11 = vsyncpa %s10, 0
    %12 = vsyncpa [#allocation6], 0
    %s13 = scalar_lea.sflag [#allocation6], 1
    %14 = vsyncpa %s13, 0
    %15 = vsyncpa [#allocation4], 0
    %16 = vsyncpa [#allocation9], 0
    loop: start=0, step=1, limit=4
    $region2: #{tpu_custom_call.1} parent=1 // loop_pre_header
      _
    $region3: #{tpu_custom_call.1} parent=1 // loop_header
      %s18 = sphi 0, %s22
      %p19 = scmp.ge.s32.totalorder %s18, 4
      %s25 = sphi 0, %s37
      %s26 = sphi 0, %s33
      %s27 = sphi 0, %s25
      %s28 = sphi 0, %s26
      %s29 = sphi 0, %s27
      %s30 = sphi 0, %s28
      %s40 = sphi 0, %s42
      %s43 = sphi 0, %s40
      %s44 = sphi 0, %s43
      %s60 = sphi 0, %s44
      %s66 = sphi 0, %s68
      %s69 = sphi 0, %s66
      %s70 = sphi 0, %s69
      %s86 = sphi 0, %s70
      %s90 = sphi 0, %s90
      %s92 = sphi 0, %s90
      %s93 = sphi 0, %s92
      %s107 = sphi 0, %s93
      %s111 = sphi 0, %s111
      %s113 = sphi 0, %s111
      %s114 = sphi 0, %s113
      %s128 = sphi 0, %s114
      %s134 = sphi 0, %s136
      %s137 = sphi 0, %s134
      %s138 = sphi 0, %s137
      %s154 = sphi 0, %s138
    $region4: #{tpu_custom_call.1} parent=1 // loop_header_branch
      %21 = sbr.rel (%p19) target = $region8
    $region5: #{tpu_custom_call.1} parent=1 // loop_body
      %s23 = ssub.s32 %s18, 1
      %s24 = ssub.s32 %s18, 2
      %s31 = sadd.s32 1, %s26
      %p32 = scmp.ge.s32.totalorder %s31, 1
      %s33 = scalar_select %p32, 0, %s31
      %s34 = sadd.s32 1, %s25
      %s35 = scalar_select %p32, %s34, %s25
      %p36 = scmp.ge.s32.totalorder %s35, 2
      %s37 = scalar_select %p36, 0, %s35
      %s38 = ssub.s32 %s25, %s37
      %p39 = scmp.eq.s32.totalorder %s38, 0
      %s41 = sadd.s32 %s40, 1
      %s42 = scalar_select %p39, %s40, %s41
      %p45 = pneg %p39
      %p46 = scmp.eq.s32.totalorder %s18, 1
      %p47 = por %p45, %p46
      %p48 = scmp.ne.s32.totalorder %s40, %s43
      %p49 = scmp.eq.s32.totalorder %s18, 0
      %p50 = por %p48, %p49
      %p51 = scmp.ne.s32.totalorder %s40, %s43
      %p52 = scmp.eq.s32.totalorder %s23, 1
      %p53 = por %p51, %p52
      %p54 = scmp.ne.s32.totalorder %s43, %s44
      %p55 = scmp.eq.s32.totalorder %s23, 0
      %p56 = por %p54, %p55
      %p57 = scmp.ne.s32.totalorder %s43, %s44
      %p58 = scmp.eq.s32.totalorder %s24, 1
      %p59 = por %p57, %p58
      %p61 = scmp.ne.s32.totalorder %s44, %s60
      %p62 = scmp.eq.s32.totalorder %s24, 0
      %p63 = por %p61, %p62
      %s64 = ssub.s32 %s25, %s37
      %p65 = scmp.eq.s32.totalorder %s64, 0
      %s67 = sadd.s32 %s66, 1
      %s68 = scalar_select %p65, %s66, %s67
      %p71 = pneg %p65
      %p72 = scmp.eq.s32.totalorder %s18, 1
      %p73 = por %p71, %p72
      %p74 = scmp.ne.s32.totalorder %s66, %s69
      %p75 = scmp.eq.s32.totalorder %s18, 0
      %p76 = por %p74, %p75
      %p77 = scmp.ne.s32.totalorder %s66, %s69
      %p78 = scmp.eq.s32.totalorder %s23, 1
      %p79 = por %p77, %p78
      %p80 = scmp.ne.s32.totalorder %s69, %s70
      %p81 = scmp.eq.s32.totalorder %s23, 0
      %p82 = por %p80, %p81
      %p83 = scmp.ne.s32.totalorder %s69, %s70
      %p84 = scmp.eq.s32.totalorder %s24, 1
      %p85 = por %p83, %p84
      %p87 = scmp.ne.s32.totalorder %s70, %s86
      %p88 = scmp.eq.s32.totalorder %s24, 0
      %p89 = por %p87, %p88
      %s91 = sadd.s32 %s90, 1
      %p94 = scmp.eq.s32.totalorder %s18, 1
      %p95 = scmp.ne.s32.totalorder %s90, %s92
      %p96 = scmp.eq.s32.totalorder %s18, 0
      %p97 = por %p95, %p96
      %p98 = scmp.ne.s32.totalorder %s90, %s92
      %p99 = scmp.eq.s32.totalorder %s23, 1
      %p100 = por %p98, %p99
      %p101 = scmp.ne.s32.totalorder %s92, %s93
      %p102 = scmp.eq.s32.totalorder %s23, 0
      %p103 = por %p101, %p102
      %p104 = scmp.ne.s32.totalorder %s92, %s93
      %p105 = scmp.eq.s32.totalorder %s24, 1
      %p106 = por %p104, %p105
      %p108 = scmp.ne.s32.totalorder %s93, %s107
      %p109 = scmp.eq.s32.totalorder %s24, 0
      %p110 = por %p108, %p109
      %s112 = sadd.s32 %s111, 1
      %p115 = scmp.eq.s32.totalorder %s18, 1
      %p116 = scmp.ne.s32.totalorder %s111, %s113
      %p117 = scmp.eq.s32.totalorder %s18, 0
      %p118 = por %p116, %p117
      %p119 = scmp.ne.s32.totalorder %s111, %s113
      %p120 = scmp.eq.s32.totalorder %s23, 1
      %p121 = por %p119, %p120
      %p122 = scmp.ne.s32.totalorder %s113, %s114
      %p123 = scmp.eq.s32.totalorder %s23, 0
      %p124 = por %p122, %p123
      %p125 = scmp.ne.s32.totalorder %s113, %s114
      %p126 = scmp.eq.s32.totalorder %s24, 1
      %p127 = por %p125, %p126
      %p129 = scmp.ne.s32.totalorder %s114, %s128
      %p130 = scmp.eq.s32.totalorder %s24, 0
      %p131 = por %p129, %p130
      %s132 = ssub.s32 %s25, %s37
      %p133 = scmp.eq.s32.totalorder %s132, 0
      %s135 = sadd.s32 %s134, 1
      %s136 = scalar_select %p133, %s134, %s135
      %p139 = pneg %p133
      %p140 = scmp.eq.s32.totalorder %s18, 1
      %p141 = por %p139, %p140
      %p142 = scmp.ne.s32.totalorder %s134, %s137
      %p143 = scmp.eq.s32.totalorder %s18, 0
      %p144 = por %p142, %p143
      %p145 = scmp.ne.s32.totalorder %s134, %s137
      %p146 = scmp.eq.s32.totalorder %s23, 1
      %p147 = por %p145, %p146
      %p148 = scmp.ne.s32.totalorder %s137, %s138
      %p149 = scmp.eq.s32.totalorder %s23, 0
      %p150 = por %p148, %p149
      %p151 = scmp.ne.s32.totalorder %s137, %s138
      %p152 = scmp.eq.s32.totalorder %s24, 1
      %p153 = por %p151, %p152
      %p155 = scmp.ne.s32.totalorder %s138, %s154
      %p156 = scmp.eq.s32.totalorder %s24, 0
      %p157 = por %p155, %p156
      %p158 = scmp.le.s32.totalorder 1, %s18
      %p159 = scmp.lt.s32.totalorder %s18, 3
      %p160 = pnand %p158, %p159
      %p161 = pneg %p160
      // Predicated region
      $region9: #{tpu_custom_call.1} parent=5 // pred_check
        _
      $region10: #{tpu_custom_call.1} parent=5 // pred_check_branch
        %163 = sbr.rel (%p160) target = $region12
      $region11: #{tpu_custom_call.1} parent=5 // pred_region
        %s164 = ssub.s32 %s18, 1
        // Predicated region
        $region13: #{tpu_custom_call.1} parent=11 // pred_check
          %p165 = pneg %p103
        $region14: #{tpu_custom_call.1} parent=11 // pred_check_branch
          %167 = sbr.rel (%p165) target = $region16
        $region15: #{tpu_custom_call.1} parent=11 // pred_region
          %s169 = ssub.s32 16, 16
          %170 = vsyncadd [#allocation4], %s169
          %s172 = sshll.u32 %s2, 4
          %s173 = int_to_ptr.vmem [resolvable:$true] %s172
          %175 = dma.vmem_to_smem %s173, 16, [#allocation7], [#allocation4]
        $region16: #{tpu_custom_call.1} parent=11 // pred_fallthru
          _
        // Predicated region
        $region17: #{tpu_custom_call.1} parent=11 // pred_check
          %p176 = pneg %p124
        $region18: #{tpu_custom_call.1} parent=11 // pred_check_branch
          %178 = sbr.rel (%p176) target = $region20
        $region19: #{tpu_custom_call.1} parent=11 // pred_region
          %s180 = ssub.s32 16, 16
          %181 = vsyncadd [#allocation9], %s180
          %s183 = sshll.u32 %s3, 4
          %s184 = int_to_ptr.vmem [resolvable:$true] %s183
          %186 = dma.vmem_to_smem %s184, 16, [#allocation8], [#allocation9]
        $region20: #{tpu_custom_call.1} parent=11 // pred_fallthru
          _
      $region12: #{tpu_custom_call.1} parent=5 // pred_fallthru
        _
      %p187 = scmp.lt.s32.totalorder %s18, 2
      // Predicated region
      $region21: #{tpu_custom_call.1} parent=5 // pred_check
        %p188 = pneg %p187
      $region22: #{tpu_custom_call.1} parent=5 // pred_check_branch
        %190 = sbr.rel (%p188) target = $region24
      $region23: #{tpu_custom_call.1} parent=5 // pred_region
        // Predicated region
        $region25: #{tpu_custom_call.1} parent=23 // pred_check
          %p191 = pneg %p50
        $region26: #{tpu_custom_call.1} parent=23 // pred_check_branch
          %193 = sbr.rel (%p191) target = $region28
        $region27: #{tpu_custom_call.1} parent=23 // pred_region
          %s194 = sand.u32 %s40, 1
          %s195 = scalar_lea.sflag [#allocation3], %s194
          %s196 = sand.u32 %s40, 1
          %s197 = smul.addr %s196, 4
          %s198 = scalar_lea.vmem [#allocation2], %s197
          %s200 = ssub.s32 64, 64
          %201 = vsyncadd %s195, %s200
          %s202 = smul.addr %s25, 64
          %s203 = scalar_lea.hbm %s0, %s202
          %s205 = sshll.u32 %s198, 4
          %s206 = int_to_ptr.vmem [resolvable:$true] %s205
          %208 = dma.hbm_to_vmem [thread:$0]  %s203, 64, %s206, %s195
        $region28: #{tpu_custom_call.1} parent=23 // pred_fallthru
          _
        // Predicated region
        $region29: #{tpu_custom_call.1} parent=23 // pred_check
          %p209 = pneg %p76
        $region30: #{tpu_custom_call.1} parent=23 // pred_check_branch
          %211 = sbr.rel (%p209) target = $region32
        $region31: #{tpu_custom_call.1} parent=23 // pred_region
          %s212 = sand.u32 %s66, 1
          %s213 = scalar_lea.sflag [#allocation6], %s212
          %s214 = sand.u32 %s66, 1
          %s215 = smul.addr %s214, 4
          %s216 = scalar_lea.vmem [#allocation5], %s215
          %s218 = ssub.s32 64, 64
          %219 = vsyncadd %s213, %s218
          %s220 = smul.addr %s25, 64
          %s221 = scalar_lea.hbm %s1, %s220
          %s223 = sshll.u32 %s216, 4
          %s224 = int_to_ptr.vmem [resolvable:$true] %s223
          %226 = dma.hbm_to_vmem [thread:$0]  %s221, 64, %s224, %s213
        $region32: #{tpu_custom_call.1} parent=23 // pred_fallthru
          _
      $region24: #{tpu_custom_call.1} parent=5 // pred_fallthru
        _
      %p227 = scmp.le.s32.totalorder 1, %s18
      %p228 = scmp.lt.s32.totalorder %s18, 3
      %p229 = pnand %p227, %p228
      %p230 = pneg %p229
      // Predicated region
      $region33: #{tpu_custom_call.1} parent=5 // pred_check
        _
      $region34: #{tpu_custom_call.1} parent=5 // pred_check_branch
        %232 = sbr.rel (%p229) target = $region36
      $region35: #{tpu_custom_call.1} parent=5 // pred_region
        %s233 = ssub.s32 %s18, 1
        %s234 = sand.u32 %s43, 1
        %s235 = scalar_lea.sflag [#allocation3], %s234
        %s236 = sand.u32 %s43, 1
        %s237 = smul.addr %s236, 4
        %s238 = scalar_lea.vmem [#allocation2], %s237
        // Predicated region
        $region37: #{tpu_custom_call.1} parent=35 // pred_check
          %p239 = pneg %p56
        $region38: #{tpu_custom_call.1} parent=35 // pred_check_branch
          %241 = sbr.rel (%p239) target = $region40
        $region39: #{tpu_custom_call.1} parent=35 // pred_region
          %242 = dma.done %s235, 64
        $region40: #{tpu_custom_call.1} parent=35 // pred_fallthru
          _
        %s243 = sand.u32 %s69, 1
        %s244 = scalar_lea.sflag [#allocation6], %s243
        %s245 = sand.u32 %s69, 1
        %s246 = smul.addr %s245, 4
        %s247 = scalar_lea.vmem [#allocation5], %s246
        // Predicated region
        $region41: #{tpu_custom_call.1} parent=35 // pred_check
          %p248 = pneg %p82
        $region42: #{tpu_custom_call.1} parent=35 // pred_check_branch
          %250 = sbr.rel (%p248) target = $region44
        $region43: #{tpu_custom_call.1} parent=35 // pred_region
          %251 = dma.done %s244, 64
        $region44: #{tpu_custom_call.1} parent=35 // pred_fallthru
          _
        // Predicated region
        $region45: #{tpu_custom_call.1} parent=35 // pred_check
          %p252 = pneg %p103
        $region46: #{tpu_custom_call.1} parent=35 // pred_check_branch
          %254 = sbr.rel (%p252) target = $region48
        $region47: #{tpu_custom_call.1} parent=35 // pred_region
          %255 = dma.done [#allocation4], 16
        $region48: #{tpu_custom_call.1} parent=35 // pred_fallthru
          _
        // Predicated region
        $region49: #{tpu_custom_call.1} parent=35 // pred_check
          %p256 = pneg %p124
        $region50: #{tpu_custom_call.1} parent=35 // pred_check_branch
          %258 = sbr.rel (%p256) target = $region52
        $region51: #{tpu_custom_call.1} parent=35 // pred_region
          %259 = dma.done [#allocation9], 16
        $region52: #{tpu_custom_call.1} parent=35 // pred_fallthru
          _
        %260 = sfence
        %s261 = sand.u32 %s43, 1
        %s262 = scalar_lea.sflag [#allocation3], %s261
        %s263 = sand.u32 %s43, 1
        %s264 = smul.addr %s263, 4
        %s265 = scalar_lea.vmem [#allocation2], %s264
        %p266 = pneg %p56
        %p267 = pneg %p53
        %s268 = sand.u32 %s69, 1
        %s269 = scalar_lea.sflag [#allocation6], %s268
        %s270 = sand.u32 %s69, 1
        %s271 = smul.addr %s270, 4
        %s272 = scalar_lea.vmem [#allocation5], %s271
        %p273 = pneg %p82
        %p274 = pneg %p79
        %p275 = pneg %p103
        %p276 = pneg %p100
        %p277 = pneg %p124
        %p278 = pneg %p121
        %p279 = pneg %p150
        %p280 = pneg %p147
        %p281 = scmp.lt.s32.totalorder %s27, 1
        %s282 = scalar_select %p281, %s27, 1
        %s283 = smul.addr %s282, 4
        %s284 = scalar_lea.vmem %s4, %s283
        %p285 = scmp.lt.s32.totalorder %s27, 1
        %s286 = scalar_select %p285, %s27, 1
        %s287 = smul.addr %s286, 4
        %s288 = scalar_lea.vmem %s4, %s287
        %v289 = vld [vmem:[%s238] sm:$0xf]
        %v290 = vld [vmem:[%s247] sm:$0xf]
        %292 = vrot.lane.b32.xlu0 %v290, 16
        %v293 = vpop.permute.xlu0 %292
        %vm295 = vcmask 130048
        %v296 = vsel %vm295, %v289, %v293
        %s297 = sld [smem:[#allocation8]]
        %v298 = vstv %s297
        %s299 = sld [smem:[#allocation8 + $0x1]]
        %v300 = vstv %s299
        %s301 = sld [smem:[#allocation8 + $0x2]]
        %v302 = vstv %s301
        %s303 = sld [smem:[#allocation7]]
        %v304 = vstv %s303
        %v305 = vmul.f32 %v304, %v296
        %v306 = vadd.f32 %v298, %v305
        %s307 = sld [smem:[#allocation7 + $0xc]]
        %v308 = vstv %s307
        %v309 = vmul.f32 %v308, %v296
        %v310 = vadd.f32 %v300, %v309
        %s311 = sld [smem:[#allocation7 + $0x18]]
        %v312 = vstv %s311
        %v313 = vmul.f32 %v312, %v296
        %v314 = vadd.f32 %v302, %v313
        %s315 = sld [smem:[#allocation7 + $0x1]]
        %v316 = vstv %s315
        %v317 = vmul.f32 %v316, %v296
        %319 = vrot.lane.b32.xlu0 %v317, 127
        %v320 = vpop.permute.xlu0 %319
        %v322 = vadd.f32 %v306, %v320
        %s323 = sld [smem:[#allocation7 + $0xd]]
        %v324 = vstv %s323
        %v325 = vmul.f32 %v324, %v296
        %327 = vrot.lane.b32.xlu0 %v325, 127
        %v328 = vpop.permute.xlu0 %327
        %v330 = vadd.f32 %v310, %v328
        %s331 = sld [smem:[#allocation7 + $0x19]]
        %v332 = vstv %s331
        %v333 = vmul.f32 %v332, %v296
        %335 = vrot.lane.b32.xlu0 %v333, 127
        %v336 = vpop.permute.xlu0 %335
        %v338 = vadd.f32 %v314, %v336
        %s339 = sld [smem:[#allocation7 + $0x2]]
        %v340 = vstv %s339
        %v341 = vmul.f32 %v340, %v296
        %343 = vrot.lane.b32.xlu0 %v341, 126
        %v344 = vpop.permute.xlu0 %343
        %v346 = vadd.f32 %v322, %v344
        %s347 = sld [smem:[#allocation7 + $0xe]]
        %v348 = vstv %s347
        %v349 = vmul.f32 %v348, %v296
        %351 = vrot.lane.b32.xlu0 %v349, 126
        %v352 = vpop.permute.xlu0 %351
        %v354 = vadd.f32 %v330, %v352
        %s355 = sld [smem:[#allocation7 + $0x1a]]
        %v356 = vstv %s355
        %v357 = vmul.f32 %v356, %v296
        %359 = vrot.lane.b32.xlu0 %v357, 126
        %v360 = vpop.permute.xlu0 %359
        %v362 = vadd.f32 %v338, %v360
        %s363 = sld [smem:[#allocation7 + $0x3]]
        %v364 = vstv %s363
        %v365 = vmul.f32 %v364, %v296
        %v367 = vrot.slane %v365, 1
        %v369 = vadd.f32 %v346, %v367
        %s370 = sld [smem:[#allocation7 + $0xf]]
        %v371 = vstv %s370
        %v372 = vmul.f32 %v371, %v296
        %v374 = vrot.slane %v372, 1
        %v376 = vadd.f32 %v354, %v374
        %s377 = sld [smem:[#allocation7 + $0x1b]]
        %v378 = vstv %s377
        %v379 = vmul.f32 %v378, %v296
        %v381 = vrot.slane %v379, 1
        %v383 = vadd.f32 %v362, %v381
        %s384 = sld [smem:[#allocation7 + $0x4]]
        %v385 = vstv %s384
        %v386 = vmul.f32 %v385, %v296
        %v388 = vrot.slane %v386, 1
        %389 = vrot.lane.b32.xlu0 %v388, 127
        %v390 = vpop.permute.xlu0 %389
        %v392 = vadd.f32 %v369, %v390
        %s393 = sld [smem:[#allocation7 + $0x10]]
        %v394 = vstv %s393
        %v395 = vmul.f32 %v394, %v296
        %v397 = vrot.slane %v395, 1
        %398 = vrot.lane.b32.xlu0 %v397, 127
        %v399 = vpop.permute.xlu0 %398
        %v401 = vadd.f32 %v376, %v399
        %s402 = sld [smem:[#allocation7 + $0x1c]]
        %v403 = vstv %s402
        %v404 = vmul.f32 %v403, %v296
        %v406 = vrot.slane %v404, 1
        %407 = vrot.lane.b32.xlu0 %v406, 127
        %v408 = vpop.permute.xlu0 %407
        %v410 = vadd.f32 %v383, %v408
        %s411 = sld [smem:[#allocation7 + $0x5]]
        %v412 = vstv %s411
        %v413 = vmul.f32 %v412, %v296
        %v415 = vrot.slane %v413, 1
        %416 = vrot.lane.b32.xlu0 %v415, 126
        %v417 = vpop.permute.xlu0 %416
        %v419 = vadd.f32 %v392, %v417
        %s420 = sld [smem:[#allocation7 + $0x11]]
        %v421 = vstv %s420
        %v422 = vmul.f32 %v421, %v296
        %v424 = vrot.slane %v422, 1
        %425 = vrot.lane.b32.xlu0 %v424, 126
        %v426 = vpop.permute.xlu0 %425
        %v428 = vadd.f32 %v401, %v426
        %s429 = sld [smem:[#allocation7 + $0x1d]]
        %v430 = vstv %s429
        %v431 = vmul.f32 %v430, %v296
        %v433 = vrot.slane %v431, 1
        %434 = vrot.lane.b32.xlu0 %v433, 126
        %v435 = vpop.permute.xlu0 %434
        %v437 = vadd.f32 %v410, %v435
        %s438 = sld [smem:[#allocation7 + $0x6]]
        %v439 = vstv %s438
        %v440 = vmul.f32 %v439, %v296
        %v442 = vrot.slane %v440, 2
        %v444 = vadd.f32 %v419, %v442
        %s445 = sld [smem:[#allocation7 + $0x12]]
        %v446 = vstv %s445
        %v447 = vmul.f32 %v446, %v296
        %v449 = vrot.slane %v447, 2
        %v451 = vadd.f32 %v428, %v449
        %s452 = sld [smem:[#allocation7 + $0x1e]]
        %v453 = vstv %s452
        %v454 = vmul.f32 %v453, %v296
        %v456 = vrot.slane %v454, 2
        %v458 = vadd.f32 %v437, %v456
        %s459 = sld [smem:[#allocation7 + $0x7]]
        %v460 = vstv %s459
        %v461 = vmul.f32 %v460, %v296
        %v463 = vrot.slane %v461, 2
        %464 = vrot.lane.b32.xlu0 %v463, 127
        %v465 = vpop.permute.xlu0 %464
        %v467 = vadd.f32 %v444, %v465
        %s468 = sld [smem:[#allocation7 + $0x13]]
        %v469 = vstv %s468
        %v470 = vmul.f32 %v469, %v296
        %v472 = vrot.slane %v470, 2
        %473 = vrot.lane.b32.xlu0 %v472, 127
        %v474 = vpop.permute.xlu0 %473
        %v476 = vadd.f32 %v451, %v474
        %s477 = sld [smem:[#allocation7 + $0x1f]]
        %v478 = vstv %s477
        %v479 = vmul.f32 %v478, %v296
        %v481 = vrot.slane %v479, 2
        %482 = vrot.lane.b32.xlu0 %v481, 127
        %v483 = vpop.permute.xlu0 %482
        %v485 = vadd.f32 %v458, %v483
        %s486 = sld [smem:[#allocation7 + $0x8]]
        %v487 = vstv %s486
        %v488 = vmul.f32 %v487, %v296
        %v490 = vrot.slane %v488, 2
        %491 = vrot.lane.b32.xlu0 %v490, 126
        %v492 = vpop.permute.xlu0 %491
        %v494 = vadd.f32 %v467, %v492
        %s495 = sld [smem:[#allocation7 + $0x14]]
        %v496 = vstv %s495
        %v497 = vmul.f32 %v496, %v296
        %v499 = vrot.slane %v497, 2
        %500 = vrot.lane.b32.xlu0 %v499, 126
        %v501 = vpop.permute.xlu0 %500
        %v503 = vadd.f32 %v476, %v501
        %s504 = sld [smem:[#allocation7 + $0x20]]
        %v505 = vstv %s504
        %v506 = vmul.f32 %v505, %v296
        %v508 = vrot.slane %v506, 2
        %509 = vrot.lane.b32.xlu0 %v508, 126
        %v510 = vpop.permute.xlu0 %509
        %v512 = vadd.f32 %v485, %v510
        %s513 = sld [smem:[#allocation7 + $0x9]]
        %v514 = vstv %s513
        %v515 = vmul.f32 %v514, %v296
        %v517 = vrot.slane %v515, 3
        %v519 = vadd.f32 %v494, %v517
        %s520 = sld [smem:[#allocation7 + $0x15]]
        %v521 = vstv %s520
        %v522 = vmul.f32 %v521, %v296
        %v524 = vrot.slane %v522, 3
        %v526 = vadd.f32 %v503, %v524
        %s527 = sld [smem:[#allocation7 + $0x21]]
        %v528 = vstv %s527
        %v529 = vmul.f32 %v528, %v296
        %v531 = vrot.slane %v529, 3
        %v533 = vadd.f32 %v512, %v531
        %s534 = sld [smem:[#allocation7 + $0xa]]
        %v535 = vstv %s534
        %v536 = vmul.f32 %v535, %v296
        %v538 = vrot.slane %v536, 3
        %539 = vrot.lane.b32.xlu0 %v538, 127
        %v540 = vpop.permute.xlu0 %539
        %v542 = vadd.f32 %v519, %v540
        %s543 = sld [smem:[#allocation7 + $0x16]]
        %v544 = vstv %s543
        %v545 = vmul.f32 %v544, %v296
        %v547 = vrot.slane %v545, 3
        %548 = vrot.lane.b32.xlu0 %v547, 127
        %v549 = vpop.permute.xlu0 %548
        %v551 = vadd.f32 %v526, %v549
        %s552 = sld [smem:[#allocation7 + $0x22]]
        %v553 = vstv %s552
        %v554 = vmul.f32 %v553, %v296
        %v556 = vrot.slane %v554, 3
        %557 = vrot.lane.b32.xlu0 %v556, 127
        %v558 = vpop.permute.xlu0 %557
        %v560 = vadd.f32 %v533, %v558
        %s561 = sld [smem:[#allocation7 + $0xb]]
        %v562 = vstv %s561
        %v563 = vmul.f32 %v562, %v296
        %v565 = vrot.slane %v563, 3
        %566 = vrot.lane.b32.xlu0 %v565, 126
        %v567 = vpop.permute.xlu0 %566
        %v569 = vadd.f32 %v542, %v567
        %s570 = sld [smem:[#allocation7 + $0x17]]
        %v571 = vstv %s570
        %v572 = vmul.f32 %v571, %v296
        %v574 = vrot.slane %v572, 3
        %575 = vrot.lane.b32.xlu0 %v574, 126
        %v576 = vpop.permute.xlu0 %575
        %v578 = vadd.f32 %v551, %v576
        %s579 = sld [smem:[#allocation7 + $0x23]]
        %v580 = vstv %s579
        %v581 = vmul.f32 %v580, %v296
        %v583 = vrot.slane %v581, 3
        %584 = vrot.lane.b32.xlu0 %v583, 126
        %v585 = vpop.permute.xlu0 %584
        %v587 = vadd.f32 %v560, %v585
        %v589 = vrot.slane %v578, 7
        %v592 = vrot.slane %v587, 6
        %vm594 = vcmask 1040384
        %v595 = vsel %vm594, %v569, %v589
        %vm596 = vcmask 1041408
        %v597 = vsel %vm596, %v595, %v592
        %599 = vrot.lane.b32.xlu0 %v597, 127
        %v600 = vpop.permute.xlu0 %599
        %vm602 = vcmask 92160
        %603 = vst.msk [vmem:[%s288] sm:$0x7] %vm602, %v600
        %p604 = scmp.lt.s32.totalorder %s27, 1
        %s605 = scalar_select %p604, %s27, 1
        %s606 = smul.addr %s605, 4
        %s607 = scalar_lea.vmem %s4, %s606
        // Predicated region
        $region53: #{tpu_custom_call.1} parent=35 // pred_check
          %p608 = pneg %p147
        $region54: #{tpu_custom_call.1} parent=35 // pred_check_branch
          %610 = sbr.rel (%p608) target = $region56
        $region55: #{tpu_custom_call.1} parent=35 // pred_region
          _
        $region56: #{tpu_custom_call.1} parent=35 // pred_fallthru
          _
      $region36: #{tpu_custom_call.1} parent=5 // pred_fallthru
        _
      %p611 = scmp.le.s32.totalorder 2, %s18
      // Predicated region
      $region57: #{tpu_custom_call.1} parent=5 // pred_check
        %p612 = pneg %p611
      $region58: #{tpu_custom_call.1} parent=5 // pred_check_branch
        %614 = sbr.rel (%p612) target = $region60
      $region59: #{tpu_custom_call.1} parent=5 // pred_region
        %s615 = ssub.s32 %s18, 2
        // Predicated region
        $region61: #{tpu_custom_call.1} parent=59 // pred_check
          %p616 = pneg %p153
        $region62: #{tpu_custom_call.1} parent=59 // pred_check_branch
          %618 = sbr.rel (%p616) target = $region64
        $region63: #{tpu_custom_call.1} parent=59 // pred_region
          %p619 = scmp.lt.s32.totalorder %s29, 1
          %s620 = scalar_select %p619, %s29, 1
          %s621 = smul.addr %s620, 4
          %s622 = scalar_lea.vmem %s4, %s621
        $region64: #{tpu_custom_call.1} parent=59 // pred_fallthru
          _
      $region60: #{tpu_custom_call.1} parent=5 // pred_fallthru
        _
    $region6: #{tpu_custom_call.1} parent=1 // loop_footer
      %s22 = sadd.s32 1, %s18
    $region7: #{tpu_custom_call.1} parent=1 // loop_footer_branch
      %17 = sbr.rel target = $region3
    $region8: #{tpu_custom_call.1} parent=1 // loop_exit
      _
    %623 = vsyncpa [#allocation3], 1
    %s624 = scalar_lea.sflag [#allocation3], 1
    %625 = vsyncpa %s624, 1
    %626 = vsyncpa [#allocation6], 1
    %s627 = scalar_lea.sflag [#allocation6], 1
    %628 = vsyncpa %s627, 1
    %629 = vsyncpa [#allocation4], 1
    %s630 = scalar_lea.sflag [#allocation4], 1
    %631 = vsyncpa %s630, 1
    %632 = vsyncpa [#allocation9], 1

</llo_original>
